<compile_context>
chip_gen: v7x
topology: tpu7x:2x2x1
jax: 0.10.0
libtpu: 0.0.40
codegen_flags: <defaults>
</compile_context>

<pallas_src>
import jax
import jax.numpy as jnp
from jax import lax
from jax.experimental import pallas as pl
from jax.experimental.pallas import tpu as pltpu

_LANE = 128


def _round_up(x, m):
    return ((x + m - 1) // m) * m


def _largest_tile(n, cap):
    """Largest multiple of 128 that divides n (n is a 128-multiple) and is <= cap."""
    best = _LANE
    t = _LANE
    cap = min(cap, n)
    while t <= cap:
        if n % t == 0:
            best = t
        t += _LANE
    return best


def _vmem_budget_bytes():
    phys = 64 << 20                      # conservative fallback (= v7x per-core VMEM)
    try:
        info = pltpu.get_tpu_info()
        phys = int(getattr(info, "vmem_capacity_bytes", phys))
    except Exception:
        pass
    return max(16 << 20, int(phys * 0.7))


# --------------------------------------------------------------------------
# Aggregation kernel: acc = (A + I) @ H tile-by-tile over k, with a fused
# epilogue (left D^{-1/2} scaling, optional linear projection, bias add).
# --------------------------------------------------------------------------
def _make_agg_kernel(project_first):
    def body(a_ref, hk_ref, hi_ref, d_ref, w_ref, b_ref, o_ref, acc_ref):
        k = pl.program_id(1)

        @pl.when(k == 0)
        def _():
            # Identity contribution: (A + I) @ H = A @ H + H -> seed acc with H[i].
            acc_ref[...] = hi_ref[...].astype(jnp.float32)

        acc_ref[...] += jnp.dot(a_ref[...], hk_ref[...],
                                preferred_element_type=jnp.float32)

        @pl.when(k == pl.num_programs(1) - 1)
        def _():
            pre = d_ref[...] * acc_ref[...]          # left D^{-1/2} scaling
            if project_first:
                out = pre + b_ref[...]
            else:
                out = jnp.dot(pre.astype(w_ref.dtype), w_ref[...],
                              preferred_element_type=jnp.float32) + b_ref[...]
            o_ref[...] = out.astype(o_ref.dtype)

    if project_first:
        def kernel(a_ref, hk_ref, hi_ref, d_ref, b_ref, o_ref, acc_ref):
            body(a_ref, hk_ref, hi_ref, d_ref, None, b_ref, o_ref, acc_ref)
    else:
        def kernel(a_ref, hk_ref, hi_ref, d_ref, w_ref, b_ref, o_ref, acc_ref):
            body(a_ref, hk_ref, hi_ref, d_ref, w_ref, b_ref, o_ref, acc_ref)
    return kernel


def gcn_layer(X, A, weight, bias, *, mxu_dtype=jnp.bfloat16):
    """GCN forward: out = D^{-1/2}(A+I)D^{-1/2} X W^T + b.

    X: [N, F_in], A: [N, N], weight: [F_out, F_in] (nn.Linear layout), bias: [F_out].
    mxu_dtype: storage / MXU dtype for A, H and W (bfloat16 default; float32 = exact).
    Degree math, the accumulator and the bias are always float32.
    """
    N, F_in = X.shape
    F_out = weight.shape[0]
    mxu_dtype = jnp.dtype(mxu_dtype)
    h_item = mxu_dtype.itemsize

    n_pad = _round_up(N, _LANE)
    f_in_pad = _round_up(F_in, _LANE)
    f_out_pad = _round_up(F_out, _LANE)

    # ---- XLA prep (fused with the pad/cast of A): degrees, d^{-1/2}, H ----
    Ap = jnp.pad(A.astype(mxu_dtype), ((0, n_pad - N), (0, n_pad - N)))   # 0/1: exact in bf16
    deg = jnp.sum(Ap[:N].astype(jnp.float32), axis=1) + 1.0               # rowsum(A_hat)
    d = lax.rsqrt(deg)                                                    # EUP rsqrt
    d = jnp.where(jnp.isinf(d), 0.0, d)                                   # inf -> 0 (torch parity)
    # TODO(synk): negative edge weights can make deg <= 0 -> NaN; the PyTorch
    # reference behaves identically, so this is intentional parity.

    H = d[:, None] * X.astype(jnp.float32)                                # D^{-1/2} X
    Wt = weight.T.astype(jnp.float32)                                     # [F_in, F_out]

    project_first = f_out_pad < f_in_pad        # run the N^2 matmul over the smaller dim
    if project_first:
        H = H @ Wt
        f_h, f_used = f_out_pad, F_out
    else:
        f_h, f_used = f_in_pad, F_in

    Hp = jnp.pad(H, ((0, n_pad - N), (0, f_h - f_used))).astype(mxu_dtype)
    dp = jnp.pad(d.reshape(N, 1), ((0, n_pad - N), (0, 0)))
    bp = jnp.pad(bias.astype(jnp.float32).reshape(1, F_out),
                 ((0, 0), (0, f_out_pad - F_out)))
    Wp = None
    if not project_first:
        Wp = jnp.pad(Wt, ((0, f_in_pad - F_in),
                          (0, f_out_pad - F_out))).astype(mxu_dtype)

    # ---- tile selection ----
    tk = _largest_tile(n_pad, 1024)             # reduction tile over A's columns
    tm = _largest_tile(n_pad, 512)              # row tile
    if n_pad // tm < 2 and n_pad > _LANE:       # keep >=2 row tiles for megacore (v7x)
        tm = _largest_tile(n_pad, max(_LANE, tm // 2))

    budget = _vmem_budget_bytes()
    w_bytes = (f_in_pad * f_out_pad * h_item) if not project_first else 0

    def vmem_bytes(tm_, tk_):
        b = 2 * (tm_ * tk_ * h_item             # A tile (double-buffered)
                 + tk_ * f_h * h_item           # H[k]
                 + tm_ * f_h * h_item           # H[i]
                 + tm_ * 4                      # d[i]
                 + f_out_pad * 4                # bias
                 + w_bytes                      # resident W (counted 2x, conservative)
                 + tm_ * f_out_pad * 4)         # output tile
        return b + tm_ * f_h * 4                # f32 accumulator scratch

    while vmem_bytes(tm, tk) > budget and (tm > _LANE or tk > _LANE):
        if tk >= tm and tk > _LANE:
            tk = _largest_tile(n_pad, tk - _LANE)
        else:
            tm = _largest_tile(n_pad, tm - _LANE)
    # TODO(synk): for very large F_in*F_out (multi-MiB W) a j-tiling of the output
    # feature axis would be needed on v7x; not required at these sizes.

    vmem_limit = int(max(16 << 20, min(budget, vmem_bytes(tm, tk) + (4 << 20))))
    grid = (n_pad // tm, n_pad // tk)

    in_specs = [
        pl.BlockSpec((tm, tk), lambda i, k: (i, k)),        # A row-block i, col-block k
        pl.BlockSpec((tk, f_h), lambda i, k: (k, 0)),       # H[k]  (matmul rhs)
        pl.BlockSpec((tm, f_h), lambda i, k: (i, 0)),       # H[i]  (identity contribution)
        pl.BlockSpec((tm, 1), lambda i, k: (i, 0)),         # d[i]
    ]
    args = [Ap, Hp, Hp, dp]
    if not project_first:
        in_specs.append(pl.BlockSpec((f_in_pad, f_out_pad), lambda i, k: (0, 0)))
        args.append(Wp)
    in_specs.append(pl.BlockSpec((1, f_out_pad), lambda i, k: (0, 0)))   # bias
    args.append(bp)

    out_p = pl.pallas_call(
        _make_agg_kernel(project_first),
        out_shape=jax.ShapeDtypeStruct((n_pad, f_out_pad), jnp.float32),
        grid_spec=pltpu.PrefetchScalarGridSpec(
            num_scalar_prefetch=0,
            grid=grid,
            in_specs=in_specs,
            out_specs=pl.BlockSpec((tm, f_out_pad), lambda i, k: (i, 0)),
            scratch_shapes=[pltpu.VMEM((tm, f_h), jnp.float32)]),
        compiler_params=pltpu.CompilerParams(
            dimension_semantics=("parallel", "arbitrary"),
            vmem_limit_bytes=vmem_limit),
    )(*args)

    return out_p[:N, :F_out]


# --------------------------------------------------------------------------
# Pure-JAX reference mirroring the PyTorch forward literally.
# --------------------------------------------------------------------------
def _reference(X, A, weight, bias):
    N = A.shape[0]
    A_hat = A + jnp.eye(N, dtype=A.dtype)
    deg = jnp.sum(A_hat, axis=1)
    D_hat = jnp.diag(deg)
    D_inv_sqrt = jnp.power(D_hat, -0.5)
    D_inv_sqrt = jnp.where(jnp.isinf(D_inv_sqrt), 0.0, D_inv_sqrt)
    A_norm = D_inv_sqrt @ A_hat @ D_inv_sqrt
    out = A_norm @ X
    return out @ weight.T + bias


def _make_inputs(key, N, F_in, F_out, p_edge):
    k_x, k_a, k_w, k_b = jax.random.split(key, 4)
    X = jax.random.normal(k_x, (N, F_in), dtype=jnp.float32)
    A_raw = (jax.random.uniform(k_a, (N, N)) > p_edge).astype(jnp.float32)
    A = jnp.triu(A_raw, 1)
    A = A + A.T
    bound = 1.0 / jnp.sqrt(jnp.float32(F_in))
    weight = jax.random.uniform(k_w, (F_out, F_in), minval=-bound, maxval=bound,
                                dtype=jnp.float32)
    bias = jax.random.uniform(k_b, (F_out,), minval=-bound, maxval=bound,
                              dtype=jnp.float32)
    return X, A, weight, bias


if __name__ == "__main__":
    key = jax.random.PRNGKey(0)
    k1, k2 = jax.random.split(key)
    gcn = jax.jit(gcn_layer, static_argnames=("mxu_dtype",))

    # Case 1: small graph, F_out >= F_in (aggregate-then-project epilogue path).
    X, A, W, b = _make_inputs(k1, N=16, F_in=16, F_out=32, p_edge=0.7)
    ref = _reference(X, A, W, b)

    out_f32 = jax.block_until_ready(gcn(X, A, W, b, mxu_dtype=jnp.float32))
    assert out_f32.shape == (16, 32)
    assert jnp.allclose(out_f32, ref, atol=1e-4, rtol=1e-4), "f32 mismatch (case 1)"

    out_bf16 = jax.block_until_ready(gcn(X, A, W, b))      # default bf16 MXU path
    assert jnp.allclose(out_bf16, ref, atol=5e-2, rtol=5e-2), "bf16 mismatch (case 1)"

    # Case 2: multi-block reduction over A (n_pad=1280 -> grid (5, 2)) and
    # F_out < F_in (project-then-aggregate path).
    X2, A2, W2, b2 = _make_inputs(k2, N=1200, F_in=160, F_out=16, p_edge=0.5)
    ref2 = _reference(X2, A2, W2, b2)

    out2 = jax.block_until_ready(gcn(X2, A2, W2, b2, mxu_dtype=jnp.float32))
    assert out2.shape == (1200, 16)
    assert jnp.allclose(out2, ref2, atol=1e-3, rtol=1e-3), "f32 mismatch (case 2)"

    out2_bf16 = jax.block_until_ready(gcn(X2, A2, W2, b2))
    rel_err = jnp.max(jnp.abs(out2_bf16 - ref2)) / (jnp.max(jnp.abs(ref2)) + 1e-6)
    assert rel_err < 2e-2, f"bf16 relative error too large (case 2): {rel_err}"

    print("KERNEL_OK")
</pallas_src>

<mosaic_0001>
module attributes {stable_mosaic.version = 11 : i64} {
  func.func @kernel(%arg0: i32, %arg1: i32, %arg2: memref<128x128xf32, #tpu.memory_space<vmem>>, %arg3: memref<128x128xf32, #tpu.memory_space<vmem>>, %arg4: memref<128x128xf32, #tpu.memory_space<vmem>>, %arg5: memref<128x1xf32, #tpu.memory_space<vmem>>, %arg6: memref<128x128xf32, #tpu.memory_space<vmem>>, %arg7: memref<1x128xf32, #tpu.memory_space<vmem>>, %arg8: memref<128x128xf32, #tpu.memory_space<vmem>>, %arg9: memref<128x128xf32, #tpu.memory_space<vmem>>) attributes {dimension_semantics = [#tpu.dimension_semantics<parallel>, #tpu.dimension_semantics<arbitrary>], iteration_bounds = array<i64: 1, 1>, scalar_prefetch = 0 : i64, scratch_operands = 1 : i64, tpu.core_type = #tpu.core_type<tc>, window_params = [{transform_indices = @transform_0, window_bounds = array<i64: 128, 128>}, {transform_indices = @transform_1, window_bounds = array<i64: 128, 128>}, {transform_indices = @transform_2, window_bounds = array<i64: 128, 128>}, {transform_indices = @transform_3, window_bounds = array<i64: 128, 1>}, {pipeline_mode = #tpu.pipeline_mode<synchronous>, transform_indices = @transform_4, window_bounds = array<i64: 128, 128>}, {pipeline_mode = #tpu.pipeline_mode<synchronous>, transform_indices = @transform_5, window_bounds = array<i64: 1, 128>}, {transform_indices = @transform_6, window_bounds = array<i64: 128, 128>}]} {
    %c0_i32 = arith.constant 0 : i32
    %0 = arith.cmpi eq, %arg1, %c0_i32 : i32
    %1 = arith.extui %0 : i1 to i32
    %c0_i32_0 = arith.constant 0 : i32
    %2 = arith.cmpi ne, %1, %c0_i32_0 : i32
    scf.if %2 {
      %c0_10 = arith.constant 0 : index
      %c0_11 = arith.constant 0 : index
      %12 = vector.load %arg4[%c0_10, %c0_11] : memref<128x128xf32, #tpu.memory_space<vmem>>, vector<128x128xf32>
      %c0_12 = arith.constant 0 : index
      %c0_13 = arith.constant 0 : index
      %13 = vector.load %arg9[%c0_12, %c0_13] : memref<128x128xf32, #tpu.memory_space<vmem>>, vector<128x128xf32>
      tpu.vector_store %arg9[%c0_12, %c0_13], %12 {strides = array<i32>} : memref<128x128xf32, #tpu.memory_space<vmem>>, vector<128x128xf32>,
    } else {
    }
    %c0 = arith.constant 0 : index
    %c0_1 = arith.constant 0 : index
    %3 = vector.load %arg9[%c0, %c0_1] : memref<128x128xf32, #tpu.memory_space<vmem>>, vector<128x128xf32>
    %c0_2 = arith.constant 0 : index
    %c0_3 = arith.constant 0 : index
    %4 = vector.load %arg2[%c0_2, %c0_3] : memref<128x128xf32, #tpu.memory_space<vmem>>, vector<128x128xf32>
    %c0_4 = arith.constant 0 : index
    %c0_5 = arith.constant 0 : index
    %5 = vector.load %arg3[%c0_4, %c0_5] : memref<128x128xf32, #tpu.memory_space<vmem>>, vector<128x128xf32>
    %cst = arith.constant dense<0.000000e+00> : vector<128x128xf32>
    %6 = tpu.matmul %4, %5, %cst {dimension_numbers = #tpu.dot_dimension_numbers<[1], [0], [0], [1], [0, 0, 1, 1], [], []>} : vector<128x128xf32>, vector<128x128xf32>, vector<128x128xf32> -> vector<128x128xf32>
    %7 = arith.addf %3, %6 : vector<128x128xf32>
    %c0_6 = arith.constant 0 : index
    %c0_7 = arith.constant 0 : index
    %8 = vector.load %arg9[%c0_6, %c0_7] : memref<128x128xf32, #tpu.memory_space<vmem>>, vector<128x128xf32>
    tpu.vector_store %arg9[%c0_6, %c0_7], %7 {strides = array<i32>} : memref<128x128xf32, #tpu.memory_space<vmem>>, vector<128x128xf32>,
    %c0_i32_8 = arith.constant 0 : i32
    %9 = arith.cmpi eq, %arg1, %c0_i32_8 : i32
    %10 = arith.extui %9 : i1 to i32
    %c0_i32_9 = arith.constant 0 : i32
    %11 = arith.cmpi ne, %10, %c0_i32_9 : i32
    scf.if %11 {
      %c0_10 = arith.constant 0 : index
      %c0_11 = arith.constant 0 : index
      %12 = vector.load %arg5[%c0_10, %c0_11] : memref<128x1xf32, #tpu.memory_space<vmem>>, vector<128x1xf32>
      %c0_12 = arith.constant 0 : index
      %c0_13 = arith.constant 0 : index
      %13 = vector.load %arg9[%c0_12, %c0_13] : memref<128x128xf32, #tpu.memory_space<vmem>>, vector<128x128xf32>
      %14 = vector.broadcast %12 : vector<128x1xf32> to vector<128x128xf32>
      %15 = arith.mulf %14, %13 : vector<128x128xf32>
      %c0_14 = arith.constant 0 : index
      %c0_15 = arith.constant 0 : index
      %16 = vector.load %arg6[%c0_14, %c0_15] : memref<128x128xf32, #tpu.memory_space<vmem>>, vector<128x128xf32>
      %cst_16 = arith.constant dense<0.000000e+00> : vector<128x128xf32>
      %17 = tpu.matmul %15, %16, %cst_16 {dimension_numbers = #tpu.dot_dimension_numbers<[1], [0], [0], [1], [0, 0, 1, 1], [], []>} : vector<128x128xf32>, vector<128x128xf32>, vector<128x128xf32> -> vector<128x128xf32>
      %c0_17 = arith.constant 0 : index
      %c0_18 = arith.constant 0 : index
      %18 = vector.load %arg7[%c0_17, %c0_18] : memref<1x128xf32, #tpu.memory_space<vmem>>, vector<1x128xf32>
      %19 = vector.broadcast %18 : vector<1x128xf32> to vector<128x128xf32>
      %20 = arith.addf %17, %19 : vector<128x128xf32>
      %c0_19 = arith.constant 0 : index
      %c0_20 = arith.constant 0 : index
      %21 = vector.load %arg8[%c0_19, %c0_20] : memref<128x128xf32, #tpu.memory_space<vmem>>, vector<128x128xf32>
      tpu.vector_store %arg8[%c0_19, %c0_20], %20 {strides = array<i32>} : memref<128x128xf32, #tpu.memory_space<vmem>>, vector<128x128xf32>,
    } else {
    }
    return
  }
  func.func @transform_0(%arg0: i32, %arg1: i32) -> (i32, i32) {
    %c0_i32 = arith.constant 0 : i32
    return %arg0, %arg1 : i32, i32
  }
  func.func @transform_1(%arg0: i32, %arg1: i32) -> (i32, i32) {
    %c0_i32 = arith.constant 0 : i32
    %c0_i32_0 = arith.constant 0 : i32
    return %arg1, %c0_i32 : i32, i32
  }
  func.func @transform_2(%arg0: i32, %arg1: i32) -> (i32, i32) {
    %c0_i32 = arith.constant 0 : i32
    %c0_i32_0 = arith.constant 0 : i32
    return %arg0, %c0_i32 : i32, i32
  }
  func.func @transform_3(%arg0: i32, %arg1: i32) -> (i32, i32) {
    %c0_i32 = arith.constant 0 : i32
    %c0_i32_0 = arith.constant 0 : i32
    return %arg0, %c0_i32 : i32, i32
  }
  func.func @transform_4(%arg0: i32, %arg1: i32) -> (i32, i32) {
    %c0_i32 = arith.constant 0 : i32
    %c0_i32_0 = arith.constant 0 : i32
    %c0_i32_1 = arith.constant 0 : i32
    return %c0_i32, %c0_i32_0 : i32, i32
  }
  func.func @transform_5(%arg0: i32, %arg1: i32) -> (i32, i32) {
    %c0_i32 = arith.constant 0 : i32
    %c0_i32_0 = arith.constant 0 : i32
    %c0_i32_1 = arith.constant 0 : i32
    return %c0_i32, %c0_i32_0 : i32, i32
  }
  func.func @transform_6(%arg0: i32, %arg1: i32) -> (i32, i32) {
    %c0_i32 = arith.constant 0 : i32
    %c0_i32_0 = arith.constant 0 : i32
    return %arg0, %c0_i32 : i32, i32
  }
}

</mosaic_0001>

<llo_original>
// kernel: gcn_layer.1
$region0: #{gcn_layer.1}
  #allocation0 [shape = 'u32[]', space=smem, size = 0x4, offset = 0x4, fixed_abs, tag = 'smem constant byte address 0x4 - core index']
  #allocation1 [shape = 'u32[144,128]{1,0:T(1,128)}', space=vmem, size = 0x12000, scoped, tag = 'internal scratch']
  #allocation2 [shape = 'f32[128,128]{1,0:T(8,128)}', space=vmem, size = 0x10000, scoped, tag = 'scratch operand']
  %s0 = inlined_call_operand.vmem [shape: f32[128,128], index: 0, kind: input, shape index: {}]
  %s1 = inlined_call_operand.vmem [shape: f32[128,128], index: 1, kind: input, shape index: {}, may-alias: {1,2}]
  %s2 = inlined_call_operand.vmem [shape: f32[128,128], index: 2, kind: input, shape index: {}, may-alias: {1,2}]
  %s3 = inlined_call_operand.vmem [shape: f32[128,1], index: 3, kind: input, shape index: {}]
  %s4 = inlined_call_operand.vmem [shape: f32[128,128], index: 4, kind: input, shape index: {}]
  %s5 = inlined_call_operand.vmem [shape: f32[1,128], index: 5, kind: input, shape index: {}]
  %s6 = inlined_call_operand.vmem [shape: f32[128,128], index: 6, kind: output, shape index: {}]
  %s7 = sld [smem:[#allocation0]]
  $region42: #{gcn_layer.1} parent=0
    _
  %s9 = ssub.s32 1, %s7
  %s10 = scalar_select 0, %s9, %s7
  // Predicated region
  $region2: #{gcn_layer.1} parent=0 // pred_check
    _
  $region3: #{gcn_layer.1} parent=0 // pred_check_branch
    %12 = sbr.rel (0) target = $region5
  $region4: #{gcn_layer.1} parent=0 // pred_region
    _
  $region5: #{gcn_layer.1} parent=0 // pred_fallthru
    _
  // Predicated region
  $region6: #{gcn_layer.1} parent=0 // pred_check
    _
  $region7: #{gcn_layer.1} parent=0 // pred_check_branch
    %14 = sbr.rel (0) target = $region9
  $region8: #{gcn_layer.1} parent=0 // pred_region
    _
  $region9: #{gcn_layer.1} parent=0 // pred_fallthru
    _
  // Predicated region
  $region10: #{gcn_layer.1} parent=0 // pred_check
    _
  $region11: #{gcn_layer.1} parent=0 // pred_check_branch
    %16 = sbr.rel (0) target = $region13
  $region12: #{gcn_layer.1} parent=0 // pred_region
    _
  $region13: #{gcn_layer.1} parent=0 // pred_fallthru
    _
  // Predicated region
  $region14: #{gcn_layer.1} parent=0 // pred_check
    _
  $region15: #{gcn_layer.1} parent=0 // pred_check_branch
    %18 = sbr.rel (0) target = $region17
  $region16: #{gcn_layer.1} parent=0 // pred_region
    _
  $region17: #{gcn_layer.1} parent=0 // pred_fallthru
    _
  // Predicated region
  $region18: #{gcn_layer.1} parent=0 // pred_check
    _
  $region19: #{gcn_layer.1} parent=0 // pred_check_branch
    %20 = sbr.rel (0) target = $region21
  $region20: #{gcn_layer.1} parent=0 // pred_region
    _
  $region21: #{gcn_layer.1} parent=0 // pred_fallthru
    _
  // Predicated region
  $region22: #{gcn_layer.1} parent=0 // pred_check
    _
  $region23: #{gcn_layer.1} parent=0 // pred_check_branch
    %22 = sbr.rel (0) target = $region25
  $region24: #{gcn_layer.1} parent=0 // pred_region
    _
  $region25: #{gcn_layer.1} parent=0 // pred_fallthru
    _
  %p23 = scmp.eq.s32.totalorder 0, 0
  // Predicated region
  $region26: #{gcn_layer.1} parent=0 // pred_check
    %p24 = pneg %p23
  $region27: #{gcn_layer.1} parent=0 // pred_check_branch
    %26 = sbr.rel (%p24) target = $region29
  $region28: #{gcn_layer.1} parent=0 // pred_region
    %v27 = vld [vmem:[%s2] sm:$0xff]
    %v28 = vld [vmem:[%s2 + $0x8] sm:$0xff]
    %v29 = vld [vmem:[%s2 + $0x10] sm:$0xff]
    %v30 = vld [vmem:[%s2 + $0x18] sm:$0xff]
    %v31 = vld [vmem:[%s2 + $0x20] sm:$0xff]
    %v32 = vld [vmem:[%s2 + $0x28] sm:$0xff]
    %v33 = vld [vmem:[%s2 + $0x30] sm:$0xff]
    %v34 = vld [vmem:[%s2 + $0x38] sm:$0xff]
    %v35 = vld [vmem:[%s2 + $0x40] sm:$0xff]
    %v36 = vld [vmem:[%s2 + $0x48] sm:$0xff]
    %v37 = vld [vmem:[%s2 + $0x50] sm:$0xff]
    %v38 = vld [vmem:[%s2 + $0x58] sm:$0xff]
    %v39 = vld [vmem:[%s2 + $0x60] sm:$0xff]
    %v40 = vld [vmem:[%s2 + $0x68] sm:$0xff]
    %v41 = vld [vmem:[%s2 + $0x70] sm:$0xff]
    %v42 = vld [vmem:[%s2 + $0x78] sm:$0xff]
    %43 = vst [vmem:[#allocation2] sm:$0xff] %v27
    %44 = vst [vmem:[#allocation2 + $0x8] sm:$0xff] %v28
    %45 = vst [vmem:[#allocation2 + $0x10] sm:$0xff] %v29
    %46 = vst [vmem:[#allocation2 + $0x18] sm:$0xff] %v30
    %47 = vst [vmem:[#allocation2 + $0x20] sm:$0xff] %v31
    %48 = vst [vmem:[#allocation2 + $0x28] sm:$0xff] %v32
    %49 = vst [vmem:[#allocation2 + $0x30] sm:$0xff] %v33
    %50 = vst [vmem:[#allocation2 + $0x38] sm:$0xff] %v34
    %51 = vst [vmem:[#allocation2 + $0x40] sm:$0xff] %v35
    %52 = vst [vmem:[#allocation2 + $0x48] sm:$0xff] %v36
    %53 = vst [vmem:[#allocation2 + $0x50] sm:$0xff] %v37
    %54 = vst [vmem:[#allocation2 + $0x58] sm:$0xff] %v38
    %55 = vst [vmem:[#allocation2 + $0x60] sm:$0xff] %v39
    %56 = vst [vmem:[#allocation2 + $0x68] sm:$0xff] %v40
    %57 = vst [vmem:[#allocation2 + $0x70] sm:$0xff] %v41
    %58 = vst [vmem:[#allocation2 + $0x78] sm:$0xff] %v42
  $region29: #{gcn_layer.1} parent=0 // pred_fallthru
    _
  %v59 = vld [vmem:[#allocation2] sm:$0xff]
  %v60 = vld [vmem:[#allocation2 + $0x8] sm:$0xff]
  %v61 = vld [vmem:[#allocation2 + $0x10] sm:$0xff]
  %v62 = vld [vmem:[#allocation2 + $0x18] sm:$0xff]
  %v63 = vld [vmem:[#allocation2 + $0x20] sm:$0xff]
  %v64 = vld [vmem:[#allocation2 + $0x28] sm:$0xff]
  %v65 = vld [vmem:[#allocation2 + $0x30] sm:$0xff]
  %v66 = vld [vmem:[#allocation2 + $0x38] sm:$0xff]
  %v67 = vld [vmem:[#allocation2 + $0x40] sm:$0xff]
  %v68 = vld [vmem:[#allocation2 + $0x48] sm:$0xff]
  %v69 = vld [vmem:[#allocation2 + $0x50] sm:$0xff]
  %v70 = vld [vmem:[#allocation2 + $0x58] sm:$0xff]
  %v71 = vld [vmem:[#allocation2 + $0x60] sm:$0xff]
  %v72 = vld [vmem:[#allocation2 + $0x68] sm:$0xff]
  %v73 = vld [vmem:[#allocation2 + $0x70] sm:$0xff]
  %v74 = vld [vmem:[#allocation2 + $0x78] sm:$0xff]
  %v75 = vld [vmem:[%s0] sm:$0xff]
  %v76 = vld [vmem:[%s0 + $0x8] sm:$0xff]
  %v77 = vld [vmem:[%s0 + $0x10] sm:$0xff]
  %v78 = vld [vmem:[%s0 + $0x18] sm:$0xff]
  %v79 = vld [vmem:[%s0 + $0x20] sm:$0xff]
  %v80 = vld [vmem:[%s0 + $0x28] sm:$0xff]
  %v81 = vld [vmem:[%s0 + $0x30] sm:$0xff]
  %v82 = vld [vmem:[%s0 + $0x38] sm:$0xff]
  %v83 = vld [vmem:[%s0 + $0x40] sm:$0xff]
  %v84 = vld [vmem:[%s0 + $0x48] sm:$0xff]
  %v85 = vld [vmem:[%s0 + $0x50] sm:$0xff]
  %v86 = vld [vmem:[%s0 + $0x58] sm:$0xff]
  %v87 = vld [vmem:[%s0 + $0x60] sm:$0xff]
  %v88 = vld [vmem:[%s0 + $0x68] sm:$0xff]
  %v89 = vld [vmem:[%s0 + $0x70] sm:$0xff]
  %v90 = vld [vmem:[%s0 + $0x78] sm:$0xff]
  %v91 = vld [vmem:[%s1] sm:$0xff]
  %v92 = vld [vmem:[%s1 + $0x8] sm:$0xff]
  %v93 = vld [vmem:[%s1 + $0x10] sm:$0xff]
  %v94 = vld [vmem:[%s1 + $0x18] sm:$0xff]
  %v95 = vld [vmem:[%s1 + $0x20] sm:$0xff]
  %v96 = vld [vmem:[%s1 + $0x28] sm:$0xff]
  %v97 = vld [vmem:[%s1 + $0x30] sm:$0xff]
  %v98 = vld [vmem:[%s1 + $0x38] sm:$0xff]
  %v99 = vld [vmem:[%s1 + $0x40] sm:$0xff]
  %v100 = vld [vmem:[%s1 + $0x48] sm:$0xff]
  %v101 = vld [vmem:[%s1 + $0x50] sm:$0xff]
  %v102 = vld [vmem:[%s1 + $0x58] sm:$0xff]
  %v103 = vld [vmem:[%s1 + $0x60] sm:$0xff]
  %v104 = vld [vmem:[%s1 + $0x68] sm:$0xff]
  %v105 = vld [vmem:[%s1 + $0x70] sm:$0xff]
  %v106 = vld [vmem:[%s1 + $0x78] sm:$0xff]
  %107 = vmatprep.subr.mxu0 0.0
  %108 = vmatpush1.msra.mxu0 %v91
  %109 = vmatprep.subr.mxu0 0.0
  %110 = vmatpush1.msra.mxu0 %v92
  %111 = vmatprep.subr.mxu0 0.0
  %112 = vmatpush1.msra.mxu0 %v93
  %113 = vmatprep.subr.mxu0 0.0
  %114 = vmatpush1.msra.mxu0 %v94
  %115 = vmatprep.subr.mxu0 0.0
  %116 = vmatpush1.msra.mxu0 %v95
  %117 = vmatprep.subr.mxu0 0.0
  %118 = vmatpush1.msra.mxu0 %v96
  %119 = vmatprep.subr.mxu0 0.0
  %120 = vmatpush1.msra.mxu0 %v97
  %121 = vmatprep.subr.mxu0 0.0
  %122 = vmatpush1.msra.mxu0 %v98
  %123 = vmatprep.subr.mxu0 0.0
  %124 = vmatpush1.msra.mxu0 %v99
  %125 = vmatprep.subr.mxu0 0.0
  %126 = vmatpush1.msra.mxu0 %v100
  %127 = vmatprep.subr.mxu0 0.0
  %128 = vmatpush1.msra.mxu0 %v101
  %129 = vmatprep.subr.mxu0 0.0
  %130 = vmatpush1.msra.mxu0 %v102
  %131 = vmatprep.subr.mxu0 0.0
  %132 = vmatpush1.msra.mxu0 %v103
  %133 = vmatprep.subr.mxu0 0.0
  %134 = vmatpush1.msra.mxu0 %v104
  %135 = vmatprep.subr.mxu0 0.0
  %136 = vmatpush1.msra.mxu0 %v105
  %137 = vmatprep.subr.mxu0 0.0
  %138 = vmatpush1.msra.mxu0 %v106
  %139 = vmatprep.subr.mxu0 0.0
  %140 = vmatpush1.msra.mxu0 0.0
  %141 = vmatprep.subr.mxu0 0.0
  %142 = vmatpush1.msra.mxu0 0.0
  %143 = vmatprep.subr.mxu0 0.0
  %144 = vmatpush1.msra.mxu0 0.0
  %145 = vmatprep.subr.mxu0 0.0
  %146 = vmatpush1.msra.mxu0 0.0
  %147 = vmatprep.subr.mxu0 0.0
  %148 = vmatpush1.msra.mxu0 0.0
  %149 = vmatprep.subr.mxu0 0.0
  %150 = vmatpush1.msra.mxu0 0.0
  %151 = vmatprep.subr.mxu0 0.0
  %152 = vmatpush1.msra.mxu0 0.0
  %153 = vmatprep.subr.mxu0 0.0
  %154 = vmatpush1.msra.mxu0 0.0
  %155 = vmatprep.subr.mxu0 0.0
  %156 = vmatpush1.msra.mxu0 0.0
  %157 = vmatprep.subr.mxu0 0.0
  %158 = vmatpush1.msra.mxu0 0.0
  %159 = vmatprep.subr.mxu0 0.0
  %160 = vmatpush1.msra.mxu0 0.0
  %161 = vmatprep.subr.mxu0 0.0
  %162 = vmatpush1.msra.mxu0 0.0
  %163 = vmatprep.subr.mxu0 0.0
  %164 = vmatpush1.msra.mxu0 0.0
  %165 = vmatprep.subr.mxu0 0.0
  %166 = vmatpush1.msra.mxu0 0.0
  %167 = vmatprep.subr.mxu0 0.0
  %168 = vmatpush1.msra.mxu0 0.0
  %169 = vmatprep.subr.mxu0 0.0
  %170 = vmatpush1.msra.mxu0 0.0
  %171 = vmatprep.mubr.f32.mxu0 0.0
  %172 = vmatmul.mubr.f32.gmra.mrb[0].mxu0 %v75
  %v173 = vpop.f32.mrb[0].mxu0
  %v174 = vadd.f32 0.0, %v173
  %v175 = vpop.f32.mrb[0].mxu0
  %176 = vmatprep.mubr.f32.mxu0 0.0
  %177 = vmatmul.mubr.f32.gmra.mrb[0].mxu0 %v76
  %v178 = vpop.f32.mrb[0].mxu0
  %v179 = vadd.f32 0.0, %v178
  %v180 = vpop.f32.mrb[0].mxu0
  %181 = vmatprep.mubr.f32.mxu0 0.0
  %182 = vmatmul.mubr.f32.gmra.mrb[0].mxu0 %v77
  %v183 = vpop.f32.mrb[0].mxu0
  %v184 = vadd.f32 0.0, %v183
  %v185 = vpop.f32.mrb[0].mxu0
  %186 = vmatprep.mubr.f32.mxu0 0.0
  %187 = vmatmul.mubr.f32.gmra.mrb[0].mxu0 %v78
  %v188 = vpop.f32.mrb[0].mxu0
  %v189 = vadd.f32 0.0, %v188
  %v190 = vpop.f32.mrb[0].mxu0
  %191 = vmatprep.mubr.f32.mxu0 0.0
  %192 = vmatmul.mubr.f32.gmra.mrb[0].mxu0 %v79
  %v193 = vpop.f32.mrb[0].mxu0
  %v194 = vadd.f32 0.0, %v193
  %v195 = vpop.f32.mrb[0].mxu0
  %196 = vmatprep.mubr.f32.mxu0 0.0
  %197 = vmatmul.mubr.f32.gmra.mrb[0].mxu0 %v80
  %v198 = vpop.f32.mrb[0].mxu0
  %v199 = vadd.f32 0.0, %v198
  %v200 = vpop.f32.mrb[0].mxu0
  %201 = vmatprep.mubr.f32.mxu0 0.0
  %202 = vmatmul.mubr.f32.gmra.mrb[0].mxu0 %v81
  %v203 = vpop.f32.mrb[0].mxu0
  %v204 = vadd.f32 0.0, %v203
  %v205 = vpop.f32.mrb[0].mxu0
  %206 = vmatprep.mubr.f32.mxu0 0.0
  %207 = vmatmul.mubr.f32.gmra.mrb[0].mxu0 %v82
  %v208 = vpop.f32.mrb[0].mxu0
  %v209 = vadd.f32 0.0, %v208
  %v210 = vpop.f32.mrb[0].mxu0
  %211 = vmatprep.mubr.f32.mxu0 0.0
  %212 = vmatmul.mubr.f32.gmra.mrb[0].mxu0 %v83
  %v213 = vpop.f32.mrb[0].mxu0
  %v214 = vadd.f32 0.0, %v213
  %v215 = vpop.f32.mrb[0].mxu0
  %216 = vmatprep.mubr.f32.mxu0 0.0
  %217 = vmatmul.mubr.f32.gmra.mrb[0].mxu0 %v84
  %v218 = vpop.f32.mrb[0].mxu0
  %v219 = vadd.f32 0.0, %v218
  %v220 = vpop.f32.mrb[0].mxu0
  %221 = vmatprep.mubr.f32.mxu0 0.0
  %222 = vmatmul.mubr.f32.gmra.mrb[0].mxu0 %v85
  %v223 = vpop.f32.mrb[0].mxu0
  %v224 = vadd.f32 0.0, %v223
  %v225 = vpop.f32.mrb[0].mxu0
  %226 = vmatprep.mubr.f32.mxu0 0.0
  %227 = vmatmul.mubr.f32.gmra.mrb[0].mxu0 %v86
  %v228 = vpop.f32.mrb[0].mxu0
  %v229 = vadd.f32 0.0, %v228
  %v230 = vpop.f32.mrb[0].mxu0
  %231 = vmatprep.mubr.f32.mxu0 0.0
  %232 = vmatmul.mubr.f32.gmra.mrb[0].mxu0 %v87
  %v233 = vpop.f32.mrb[0].mxu0
  %v234 = vadd.f32 0.0, %v233
  %v235 = vpop.f32.mrb[0].mxu0
  %236 = vmatprep.mubr.f32.mxu0 0.0
  %237 = vmatmul.mubr.f32.gmra.mrb[0].mxu0 %v88
  %v238 = vpop.f32.mrb[0].mxu0
  %v239 = vadd.f32 0.0, %v238
  %v240 = vpop.f32.mrb[0].mxu0
  %241 = vmatprep.mubr.f32.mxu0 0.0
  %242 = vmatmul.mubr.f32.gmra.mrb[0].mxu0 %v89
  %v243 = vpop.f32.mrb[0].mxu0
  %v244 = vadd.f32 0.0, %v243
  %v245 = vpop.f32.mrb[0].mxu0
  %246 = vmatprep.mubr.f32.mxu0 0.0
  %247 = vmatmul.mubr.f32.gmra.mrb[0].mxu0 %v90
  %v248 = vpop.f32.mrb[0].mxu0
  %v249 = vadd.f32 0.0, %v248
  %v250 = vpop.f32.mrb[0].mxu0
  %251 = vdwg.mxu0
  %v252 = vadd.f32 %v59, %v174
  %v253 = vadd.f32 %v60, %v179
  %v254 = vadd.f32 %v61, %v184
  %v255 = vadd.f32 %v62, %v189
  %v256 = vadd.f32 %v63, %v194
  %v257 = vadd.f32 %v64, %v199
  %v258 = vadd.f32 %v65, %v204
  %v259 = vadd.f32 %v66, %v209
  %v260 = vadd.f32 %v67, %v214
  %v261 = vadd.f32 %v68, %v219
  %v262 = vadd.f32 %v69, %v224
  %v263 = vadd.f32 %v70, %v229
  %v264 = vadd.f32 %v71, %v234
  %v265 = vadd.f32 %v72, %v239
  %v266 = vadd.f32 %v73, %v244
  %v267 = vadd.f32 %v74, %v249
  %268 = vst [vmem:[#allocation2] sm:$0xff] %v252
  %269 = vst [vmem:[#allocation2 + $0x8] sm:$0xff] %v253
  %270 = vst [vmem:[#allocation2 + $0x10] sm:$0xff] %v254
  %271 = vst [vmem:[#allocation2 + $0x18] sm:$0xff] %v255
  %272 = vst [vmem:[#allocation2 + $0x20] sm:$0xff] %v256
  %273 = vst [vmem:[#allocation2 + $0x28] sm:$0xff] %v257
  %274 = vst [vmem:[#allocation2 + $0x30] sm:$0xff] %v258
  %275 = vst [vmem:[#allocation2 + $0x38] sm:$0xff] %v259
  %276 = vst [vmem:[#allocation2 + $0x40] sm:$0xff] %v260
  %277 = vst [vmem:[#allocation2 + $0x48] sm:$0xff] %v261
  %278 = vst [vmem:[#allocation2 + $0x50] sm:$0xff] %v262
  %279 = vst [vmem:[#allocation2 + $0x58] sm:$0xff] %v263
  %280 = vst [vmem:[#allocation2 + $0x60] sm:$0xff] %v264
  %281 = vst [vmem:[#allocation2 + $0x68] sm:$0xff] %v265
  %282 = vst [vmem:[#allocation2 + $0x70] sm:$0xff] %v266
  %283 = vst [vmem:[#allocation2 + $0x78] sm:$0xff] %v267
  // Predicated region
  $region30: #{gcn_layer.1} parent=0 // pred_check
    %p284 = pneg %p23
  $region31: #{gcn_layer.1} parent=0 // pred_check_branch
    %286 = sbr.rel (%p284) target = $region33
  $region32: #{gcn_layer.1} parent=0 // pred_region
    %v287 = vld [vmem:[%s3] sm:$0xff]
    %v288 = vld [vmem:[%s3 + $0x8] sm:$0xff]
    %v289 = vld [vmem:[%s3 + $0x10] sm:$0xff]
    %v290 = vld [vmem:[%s3 + $0x18] sm:$0xff]
    %v291 = vld [vmem:[%s3 + $0x20] sm:$0xff]
    %v292 = vld [vmem:[%s3 + $0x28] sm:$0xff]
    %v293 = vld [vmem:[%s3 + $0x30] sm:$0xff]
    %v294 = vld [vmem:[%s3 + $0x38] sm:$0xff]
    %v295 = vld [vmem:[%s3 + $0x40] sm:$0xff]
    %v296 = vld [vmem:[%s3 + $0x48] sm:$0xff]
    %v297 = vld [vmem:[%s3 + $0x50] sm:$0xff]
    %v298 = vld [vmem:[%s3 + $0x58] sm:$0xff]
    %v299 = vld [vmem:[%s3 + $0x60] sm:$0xff]
    %v300 = vld [vmem:[%s3 + $0x68] sm:$0xff]
    %v301 = vld [vmem:[%s3 + $0x70] sm:$0xff]
    %v302 = vld [vmem:[%s3 + $0x78] sm:$0xff]
    %v303 = vld [vmem:[#allocation2] sm:$0xff]
    %v304 = vld [vmem:[#allocation2 + $0x8] sm:$0xff]
    %v305 = vld [vmem:[#allocation2 + $0x10] sm:$0xff]
    %v306 = vld [vmem:[#allocation2 + $0x18] sm:$0xff]
    %v307 = vld [vmem:[#allocation2 + $0x20] sm:$0xff]
    %v308 = vld [vmem:[#allocation2 + $0x28] sm:$0xff]
    %v309 = vld [vmem:[#allocation2 + $0x30] sm:$0xff]
    %v310 = vld [vmem:[#allocation2 + $0x38] sm:$0xff]
    %v311 = vld [vmem:[#allocation2 + $0x40] sm:$0xff]
    %v312 = vld [vmem:[#allocation2 + $0x48] sm:$0xff]
    %v313 = vld [vmem:[#allocation2 + $0x50] sm:$0xff]
    %v314 = vld [vmem:[#allocation2 + $0x58] sm:$0xff]
    %v315 = vld [vmem:[#allocation2 + $0x60] sm:$0xff]
    %v316 = vld [vmem:[#allocation2 + $0x68] sm:$0xff]
    %v317 = vld [vmem:[#allocation2 + $0x70] sm:$0xff]
    %v318 = vld [vmem:[#allocation2 + $0x78] sm:$0xff]
    %320 = vset.pattern.permute.xlu0 0
    %321 = vperm.xlu0 %320, %v287
    %v322 = vpop.permute.xlu0 %321
    %325 = vset.pattern.permute.xlu0 0
    %326 = vperm.xlu0 %325, %v288
    %v327 = vpop.permute.xlu0 %326
    %330 = vset.pattern.permute.xlu0 0
    %331 = vperm.xlu0 %330, %v289
    %v332 = vpop.permute.xlu0 %331
    %335 = vset.pattern.permute.xlu0 0
    %336 = vperm.xlu0 %335, %v290
    %v337 = vpop.permute.xlu0 %336
    %340 = vset.pattern.permute.xlu0 0
    %341 = vperm.xlu0 %340, %v291
    %v342 = vpop.permute.xlu0 %341
    %345 = vset.pattern.permute.xlu0 0
    %346 = vperm.xlu0 %345, %v292
    %v347 = vpop.permute.xlu0 %346
    %350 = vset.pattern.permute.xlu0 0
    %351 = vperm.xlu0 %350, %v293
    %v352 = vpop.permute.xlu0 %351
    %355 = vset.pattern.permute.xlu0 0
    %356 = vperm.xlu0 %355, %v294
    %v357 = vpop.permute.xlu0 %356
    %360 = vset.pattern.permute.xlu0 0
    %361 = vperm.xlu0 %360, %v295
    %v362 = vpop.permute.xlu0 %361
    %365 = vset.pattern.permute.xlu0 0
    %366 = vperm.xlu0 %365, %v296
    %v367 = vpop.permute.xlu0 %366
    %370 = vset.pattern.permute.xlu0 0
    %371 = vperm.xlu0 %370, %v297
    %v372 = vpop.permute.xlu0 %371
    %375 = vset.pattern.permute.xlu0 0
    %376 = vperm.xlu0 %375, %v298
    %v377 = vpop.permute.xlu0 %376
    %380 = vset.pattern.permute.xlu0 0
    %381 = vperm.xlu0 %380, %v299
    %v382 = vpop.permute.xlu0 %381
    %385 = vset.pattern.permute.xlu0 0
    %386 = vperm.xlu0 %385, %v300
    %v387 = vpop.permute.xlu0 %386
    %390 = vset.pattern.permute.xlu0 0
    %391 = vperm.xlu0 %390, %v301
    %v392 = vpop.permute.xlu0 %391
    %395 = vset.pattern.permute.xlu0 0
    %396 = vperm.xlu0 %395, %v302
    %v397 = vpop.permute.xlu0 %396
    %v399 = vmul.f32 %v322, %v303
    %v400 = vmul.f32 %v327, %v304
    %v401 = vmul.f32 %v332, %v305
    %v402 = vmul.f32 %v337, %v306
    %v403 = vmul.f32 %v342, %v307
    %v404 = vmul.f32 %v347, %v308
    %v405 = vmul.f32 %v352, %v309
    %v406 = vmul.f32 %v357, %v310
    %v407 = vmul.f32 %v362, %v311
    %v408 = vmul.f32 %v367, %v312
    %v409 = vmul.f32 %v372, %v313
    %v410 = vmul.f32 %v377, %v314
    %v411 = vmul.f32 %v382, %v315
    %v412 = vmul.f32 %v387, %v316
    %v413 = vmul.f32 %v392, %v317
    %v414 = vmul.f32 %v397, %v318
    %v415 = vld [vmem:[%s4] sm:$0xff]
    %v416 = vld [vmem:[%s4 + $0x8] sm:$0xff]
    %v417 = vld [vmem:[%s4 + $0x10] sm:$0xff]
    %v418 = vld [vmem:[%s4 + $0x18] sm:$0xff]
    %v419 = vld [vmem:[%s4 + $0x20] sm:$0xff]
    %v420 = vld [vmem:[%s4 + $0x28] sm:$0xff]
    %v421 = vld [vmem:[%s4 + $0x30] sm:$0xff]
    %v422 = vld [vmem:[%s4 + $0x38] sm:$0xff]
    %v423 = vld [vmem:[%s4 + $0x40] sm:$0xff]
    %v424 = vld [vmem:[%s4 + $0x48] sm:$0xff]
    %v425 = vld [vmem:[%s4 + $0x50] sm:$0xff]
    %v426 = vld [vmem:[%s4 + $0x58] sm:$0xff]
    %v427 = vld [vmem:[%s4 + $0x60] sm:$0xff]
    %v428 = vld [vmem:[%s4 + $0x68] sm:$0xff]
    %v429 = vld [vmem:[%s4 + $0x70] sm:$0xff]
    %v430 = vld [vmem:[%s4 + $0x78] sm:$0xff]
    %v431 = vld [vmem:[%s5] sm:$0x1]
    %v433 = vlaneseq
    %v434 = vshrl.u32 %v433, 7
    %v435 = vsub.s32 0, %v434
    %v436 = vrot.slane %v431, %v435
    %438 = vmatprep.subr.mxu0 0.0
    %439 = vmatpush1.msra.mxu0 %v415
    %440 = vmatprep.subr.mxu0 0.0
    %441 = vmatpush1.msra.mxu0 %v416
    %442 = vmatprep.subr.mxu0 0.0
    %443 = vmatpush1.msra.mxu0 %v417
    %444 = vmatprep.subr.mxu0 0.0
    %445 = vmatpush1.msra.mxu0 %v418
    %446 = vmatprep.subr.mxu0 0.0
    %447 = vmatpush1.msra.mxu0 %v419
    %448 = vmatprep.subr.mxu0 0.0
    %449 = vmatpush1.msra.mxu0 %v420
    %450 = vmatprep.subr.mxu0 0.0
    %451 = vmatpush1.msra.mxu0 %v421
    %452 = vmatprep.subr.mxu0 0.0
    %453 = vmatpush1.msra.mxu0 %v422
    %454 = vmatprep.subr.mxu0 0.0
    %455 = vmatpush1.msra.mxu0 %v423
    %456 = vmatprep.subr.mxu0 0.0
    %457 = vmatpush1.msra.mxu0 %v424
    %458 = vmatprep.subr.mxu0 0.0
    %459 = vmatpush1.msra.mxu0 %v425
    %460 = vmatprep.subr.mxu0 0.0
    %461 = vmatpush1.msra.mxu0 %v426
    %462 = vmatprep.subr.mxu0 0.0
    %463 = vmatpush1.msra.mxu0 %v427
    %464 = vmatprep.subr.mxu0 0.0
    %465 = vmatpush1.msra.mxu0 %v428
    %466 = vmatprep.subr.mxu0 0.0
    %467 = vmatpush1.msra.mxu0 %v429
    %468 = vmatprep.subr.mxu0 0.0
    %469 = vmatpush1.msra.mxu0 %v430
    %470 = vmatprep.subr.mxu0 0.0
    %471 = vmatpush1.msra.mxu0 0.0
    %472 = vmatprep.subr.mxu0 0.0
    %473 = vmatpush1.msra.mxu0 0.0
    %474 = vmatprep.subr.mxu0 0.0
    %475 = vmatpush1.msra.mxu0 0.0
    %476 = vmatprep.subr.mxu0 0.0
    %477 = vmatpush1.msra.mxu0 0.0
    %478 = vmatprep.subr.mxu0 0.0
    %479 = vmatpush1.msra.mxu0 0.0
    %480 = vmatprep.subr.mxu0 0.0
    %481 = vmatpush1.msra.mxu0 0.0
    %482 = vmatprep.subr.mxu0 0.0
    %483 = vmatpush1.msra.mxu0 0.0
    %484 = vmatprep.subr.mxu0 0.0
    %485 = vmatpush1.msra.mxu0 0.0
    %486 = vmatprep.subr.mxu0 0.0
    %487 = vmatpush1.msra.mxu0 0.0
    %488 = vmatprep.subr.mxu0 0.0
    %489 = vmatpush1.msra.mxu0 0.0
    %490 = vmatprep.subr.mxu0 0.0
    %491 = vmatpush1.msra.mxu0 0.0
    %492 = vmatprep.subr.mxu0 0.0
    %493 = vmatpush1.msra.mxu0 0.0
    %494 = vmatprep.subr.mxu0 0.0
    %495 = vmatpush1.msra.mxu0 0.0
    %496 = vmatprep.subr.mxu0 0.0
    %497 = vmatpush1.msra.mxu0 0.0
    %498 = vmatprep.subr.mxu0 0.0
    %499 = vmatpush1.msra.mxu0 0.0
    %500 = vmatprep.subr.mxu0 0.0
    %501 = vmatpush1.msra.mxu0 0.0
    %502 = vmatprep.mubr.f32.mxu0 0.0
    %503 = vmatmul.mubr.f32.gmra.mrb[0].mxu0 %v399
    %v504 = vpop.f32.mrb[0].mxu0
    %v505 = vadd.f32 %v436, %v504
    %v506 = vpop.f32.mrb[0].mxu0
    %507 = vmatprep.mubr.f32.mxu0 0.0
    %508 = vmatmul.mubr.f32.gmra.mrb[0].mxu0 %v400
    %v509 = vpop.f32.mrb[0].mxu0
    %v510 = vadd.f32 %v436, %v509
    %v511 = vpop.f32.mrb[0].mxu0
    %512 = vmatprep.mubr.f32.mxu0 0.0
    %513 = vmatmul.mubr.f32.gmra.mrb[0].mxu0 %v401
    %v514 = vpop.f32.mrb[0].mxu0
    %v515 = vadd.f32 %v436, %v514
    %v516 = vpop.f32.mrb[0].mxu0
    %517 = vmatprep.mubr.f32.mxu0 0.0
    %518 = vmatmul.mubr.f32.gmra.mrb[0].mxu0 %v402
    %v519 = vpop.f32.mrb[0].mxu0
    %v520 = vadd.f32 %v436, %v519
    %v521 = vpop.f32.mrb[0].mxu0
    %522 = vmatprep.mubr.f32.mxu0 0.0
    %523 = vmatmul.mubr.f32.gmra.mrb[0].mxu0 %v403
    %v524 = vpop.f32.mrb[0].mxu0
    %v525 = vadd.f32 %v436, %v524
    %v526 = vpop.f32.mrb[0].mxu0
    %527 = vmatprep.mubr.f32.mxu0 0.0
    %528 = vmatmul.mubr.f32.gmra.mrb[0].mxu0 %v404
    %v529 = vpop.f32.mrb[0].mxu0
    %v530 = vadd.f32 %v436, %v529
    %v531 = vpop.f32.mrb[0].mxu0
    %532 = vmatprep.mubr.f32.mxu0 0.0
    %533 = vmatmul.mubr.f32.gmra.mrb[0].mxu0 %v405
    %v534 = vpop.f32.mrb[0].mxu0
    %v535 = vadd.f32 %v436, %v534
    %v536 = vpop.f32.mrb[0].mxu0
    %537 = vmatprep.mubr.f32.mxu0 0.0
    %538 = vmatmul.mubr.f32.gmra.mrb[0].mxu0 %v406
    %v539 = vpop.f32.mrb[0].mxu0
    %v540 = vadd.f32 %v436, %v539
    %v541 = vpop.f32.mrb[0].mxu0
    %542 = vmatprep.mubr.f32.mxu0 0.0
    %543 = vmatmul.mubr.f32.gmra.mrb[0].mxu0 %v407
    %v544 = vpop.f32.mrb[0].mxu0
    %v545 = vadd.f32 %v436, %v544
    %v546 = vpop.f32.mrb[0].mxu0
    %547 = vmatprep.mubr.f32.mxu0 0.0
    %548 = vmatmul.mubr.f32.gmra.mrb[0].mxu0 %v408
    %v549 = vpop.f32.mrb[0].mxu0
    %v550 = vadd.f32 %v436, %v549
    %v551 = vpop.f32.mrb[0].mxu0
    %552 = vmatprep.mubr.f32.mxu0 0.0
    %553 = vmatmul.mubr.f32.gmra.mrb[0].mxu0 %v409
    %v554 = vpop.f32.mrb[0].mxu0
    %v555 = vadd.f32 %v436, %v554
    %v556 = vpop.f32.mrb[0].mxu0
    %557 = vmatprep.mubr.f32.mxu0 0.0
    %558 = vmatmul.mubr.f32.gmra.mrb[0].mxu0 %v410
    %v559 = vpop.f32.mrb[0].mxu0
    %v560 = vadd.f32 %v436, %v559
    %v561 = vpop.f32.mrb[0].mxu0
    %562 = vmatprep.mubr.f32.mxu0 0.0
    %563 = vmatmul.mubr.f32.gmra.mrb[0].mxu0 %v411
    %v564 = vpop.f32.mrb[0].mxu0
    %v565 = vadd.f32 %v436, %v564
    %v566 = vpop.f32.mrb[0].mxu0
    %567 = vmatprep.mubr.f32.mxu0 0.0
    %568 = vmatmul.mubr.f32.gmra.mrb[0].mxu0 %v412
    %v569 = vpop.f32.mrb[0].mxu0
    %v570 = vadd.f32 %v436, %v569
    %v571 = vpop.f32.mrb[0].mxu0
    %572 = vmatprep.mubr.f32.mxu0 0.0
    %573 = vmatmul.mubr.f32.gmra.mrb[0].mxu0 %v413
    %v574 = vpop.f32.mrb[0].mxu0
    %v575 = vadd.f32 %v436, %v574
    %v576 = vpop.f32.mrb[0].mxu0
    %577 = vmatprep.mubr.f32.mxu0 0.0
    %578 = vmatmul.mubr.f32.gmra.mrb[0].mxu0 %v414
    %v579 = vpop.f32.mrb[0].mxu0
    %v580 = vadd.f32 %v436, %v579
    %v581 = vpop.f32.mrb[0].mxu0
    %582 = vdwg.mxu0
    %583 = vst [vmem:[%s6] sm:$0xff] %v505
    %584 = vst [vmem:[%s6 + $0x8] sm:$0xff] %v510
    %585 = vst [vmem:[%s6 + $0x10] sm:$0xff] %v515
    %586 = vst [vmem:[%s6 + $0x18] sm:$0xff] %v520
    %587 = vst [vmem:[%s6 + $0x20] sm:$0xff] %v525
    %588 = vst [vmem:[%s6 + $0x28] sm:$0xff] %v530
    %589 = vst [vmem:[%s6 + $0x30] sm:$0xff] %v535
    %590 = vst [vmem:[%s6 + $0x38] sm:$0xff] %v540
    %591 = vst [vmem:[%s6 + $0x40] sm:$0xff] %v545
    %592 = vst [vmem:[%s6 + $0x48] sm:$0xff] %v550
    %593 = vst [vmem:[%s6 + $0x50] sm:$0xff] %v555
    %594 = vst [vmem:[%s6 + $0x58] sm:$0xff] %v560
    %595 = vst [vmem:[%s6 + $0x60] sm:$0xff] %v565
    %596 = vst [vmem:[%s6 + $0x68] sm:$0xff] %v570
    %597 = vst [vmem:[%s6 + $0x70] sm:$0xff] %v575
    %598 = vst [vmem:[%s6 + $0x78] sm:$0xff] %v580
  $region33: #{gcn_layer.1} parent=0 // pred_fallthru
    _
  // Predicated region
  $region34: #{gcn_layer.1} parent=0 // pred_check
    _
  $region35: #{gcn_layer.1} parent=0 // pred_check_branch
    %600 = sbr.rel (0) target = $region37
  $region36: #{gcn_layer.1} parent=0 // pred_region
    _
  $region37: #{gcn_layer.1} parent=0 // pred_fallthru
    _
  // Predicated region
  $region38: #{gcn_layer.1} parent=0 // pred_check
    _
  $region39: #{gcn_layer.1} parent=0 // pred_check_branch
    %602 = sbr.rel (0) target = $region41
  $region40: #{gcn_layer.1} parent=0 // pred_region
    _
  $region41: #{gcn_layer.1} parent=0 // pred_fallthru
    _

</llo_original>
